<compile_context>
chip_gen: v6e
topology: v6e:2x2x1
jax: 0.10.0
libtpu: 0.0.40
codegen_flags: <defaults>
</compile_context>

<pallas_src>
import jax
import jax.numpy as jnp
from jax import lax
from jax.experimental import pallas as pl
from jax.experimental.pallas import tpu as pltpu

LANE = 128       # TPU lane width (last-dim tile)
SUBLANE = 8      # TPU sublane width (second-to-last-dim tile)
NEG_BIG = -1e30  # actor pad-logit bias -> exp underflows to exactly 0


def _round_up(x, m):
    return (x + m - 1) // m * m


# --------------------------------------------------------------------------
# Kernel (factory closes over static layout constants)
# --------------------------------------------------------------------------
def make_ppo_kernel(a_lanes, input_dim):
    """a_lanes: lanes of the actor (softmax) segment; critic lives at lane
    `a_lanes + input_dim` inside the decoder segment."""

    def ppo_kernel(x_ref,
                   w1_ref, b1_ref,      # encoder layer 1
                   w2_ref, b2_ref,      # encoder layer 2
                   wh_ref, bh_ref,      # fused heads [actor | decoder+critic]
                   out_ref):            # packed (TB, a_lanes + dec_lanes) slab
        cdt = w1_ref.dtype              # compute dtype for MXU operands (bf16/f32)

        # ---- encoder: Linear -> ReLU -> Linear -> ReLU (f32 accumulation) ----
        x = x_ref[...].astype(cdt)
        h1 = jnp.dot(x, w1_ref[...], preferred_element_type=jnp.float32) + b1_ref[...]
        h1 = jnp.maximum(h1, 0.0).astype(cdt)
        latent = jnp.dot(h1, w2_ref[...], preferred_element_type=jnp.float32) + b2_ref[...]
        latent = jnp.maximum(latent, 0.0).astype(cdt)

        # ---- fused heads: one wide MXU push (actor | decoder+critic) ----
        head = jnp.dot(latent, wh_ref[...], preferred_element_type=jnp.float32) + bh_ref[...]

        # actor: softmax over the first segment (pad lanes carry bias -1e30 so
        # exp() is exactly 0 and they don't perturb max / sum)
        logits = head[:, 0:a_lanes]
        m = jnp.max(logits, axis=-1, keepdims=True)
        e = jnp.exp(logits - m)
        inv = pl.reciprocal(jnp.sum(e, axis=-1, keepdims=True), approx=False)
        out_ref[:, 0:a_lanes] = (e * inv).astype(out_ref.dtype)

        # decoder (+ folded critic): ReLU only on the first `input_dim` lanes of
        # the segment; lane `input_dim` holds the raw critic value (no ReLU);
        # remaining pad lanes are exactly 0 (zero weights & bias).
        seg = head[:, a_lanes:]
        lane = lax.broadcasted_iota(jnp.int32, seg.shape, 1)
        seg = jnp.where(lane < input_dim, jnp.maximum(seg, 0.0), seg)
        out_ref[:, a_lanes:] = seg.astype(out_ref.dtype)

    return ppo_kernel


# --------------------------------------------------------------------------
# Parameter construction / packing
# --------------------------------------------------------------------------
def init_params(key, input_dim, output_dim, hidden_dim=128):
    """Logical (unpadded) params; weights are (in, out) = transposed nn.Linear."""
    keys = jax.random.split(key, 10)

    def linear(kw, kb, fan_in, fan_out):
        scale = 1.0 / jnp.sqrt(jnp.float32(fan_in))
        w = jax.random.normal(kw, (fan_in, fan_out), dtype=jnp.float32) * scale
        b = jax.random.normal(kb, (fan_out,), dtype=jnp.float32) * scale
        return w, b

    w1, b1 = linear(keys[0], keys[1], input_dim, hidden_dim)
    w2, b2 = linear(keys[2], keys[3], hidden_dim, hidden_dim)
    wa, ba = linear(keys[4], keys[5], hidden_dim, output_dim)
    wc, bc = linear(keys[6], keys[7], hidden_dim, 1)
    wd, bd = linear(keys[8], keys[9], hidden_dim, input_dim)
    return dict(w1=w1, b1=b1, w2=w2, b2=b2,
                wa=wa, ba=ba, wc=wc, bc=bc, wd=wd, bd=bd)


def pack_params(p, input_dim, output_dim, hidden_dim, dtype=jnp.bfloat16):
    """Pad to lane-friendly shapes, fuse actor/decoder/critic into one head
    matrix, and cast the matmul weights to `dtype` (bf16 default; f32 for
    strict validation).  Biases stay f32 (added after the f32-accumulated dot)."""
    h_p = _round_up(hidden_dim, LANE)
    a_lanes = _round_up(output_dim, LANE)
    d_lanes = _round_up(input_dim + 1, LANE)      # decoder lanes + 1 critic lane
    head_p = a_lanes + d_lanes

    def pad_w(w, rows, cols):
        return jnp.zeros((rows, cols), jnp.float32).at[:w.shape[0], :w.shape[1]].set(w)

    w1 = pad_w(p["w1"], input_dim, h_p).astype(dtype)     # no row padding needed
    b1 = jnp.zeros((1, h_p), jnp.float32).at[0, :hidden_dim].set(p["b1"])
    w2 = pad_w(p["w2"], h_p, h_p).astype(dtype)
    b2 = jnp.zeros((1, h_p), jnp.float32).at[0, :hidden_dim].set(p["b2"])

    # fused head: [ actor (a_lanes) | decoder (input_dim) critic (1) pad ... ]
    wh = jnp.zeros((h_p, head_p), jnp.float32)
    wh = wh.at[:hidden_dim, 0:output_dim].set(p["wa"])
    wh = wh.at[:hidden_dim, a_lanes:a_lanes + input_dim].set(p["wd"])
    wh = wh.at[:hidden_dim, a_lanes + input_dim:a_lanes + input_dim + 1].set(p["wc"])
    wh = wh.astype(dtype)

    bh = jnp.zeros((1, head_p), jnp.float32)
    bh = bh.at[0, 0:a_lanes].set(NEG_BIG)                  # actor padding -> exp == 0
    bh = bh.at[0, 0:output_dim].set(p["ba"])
    bh = bh.at[0, a_lanes:a_lanes + input_dim].set(p["bd"])
    bh = bh.at[0, a_lanes + input_dim].set(p["bc"][0])

    return dict(w1=w1, b1=b1, w2=w2, b2=b2, wh=wh, bh=bh)


# --------------------------------------------------------------------------
# Host wrapper
# --------------------------------------------------------------------------
def ppo_forward(state, packed, *, input_dim, output_dim, tile_batch=1024):
    """state: (batch, input_dim) f32.  Returns (probs, value, reconstructed)
    in the compute dtype of `packed` (bf16 on the fast path, f32 otherwise)."""
    batch = state.shape[0]
    h_p = packed["w1"].shape[1]
    head_p = packed["wh"].shape[1]
    a_lanes = _round_up(output_dim, LANE)
    out_dtype = jnp.bfloat16 if packed["w1"].dtype == jnp.bfloat16 else jnp.float32

    # batch tile: multiple of 8 sublanes, capped; for large batches ensure the
    # grid has >= 4 steps (2 per v7x TensorCore, >= 2 per core for pipelining).
    tb = min(_round_up(tile_batch, SUBLANE), _round_up(batch, SUBLANE))
    if batch >= 4 * SUBLANE:
        tb = min(tb, _round_up(-(-batch // 4), SUBLANE))
    tb = max(tb, SUBLANE)
    b_pad = _round_up(batch, tb)

    # raw (narrow) input — no 128-lane column padding in HBM
    x = state.astype(jnp.float32)
    if b_pad != batch:
        x = jnp.zeros((b_pad, input_dim), jnp.float32).at[:batch].set(x)

    grid = (b_pad // tb,)
    const = lambda i: (0, 0)                               # weights stay VMEM-resident

    # VMEM budget: 2x input tile + 2x output tile + weights + f32 intermediates
    out_isize = jnp.dtype(out_dtype).itemsize
    w_bytes = sum(int(packed[k].size) * packed[k].dtype.itemsize
                  for k in ("w1", "b1", "w2", "b2", "wh", "bh"))
    dma_bytes = 2 * tb * input_dim * 4 + 2 * tb * head_p * out_isize
    interm_bytes = 4 * tb * (2 * h_p + head_p) * 4         # generous f32 headroom
    vmem_limit = int(min(max(2 * (dma_bytes + w_bytes) + interm_bytes, 32 << 20), 48 << 20))

    flops = 2 * b_pad * (input_dim * h_p + h_p * h_p + h_p * head_p)
    bytes_accessed = (b_pad * input_dim * 4 + b_pad * head_p * out_isize + w_bytes)

    out = pl.pallas_call(
        make_ppo_kernel(a_lanes, input_dim),
        out_shape=jax.ShapeDtypeStruct((b_pad, head_p), out_dtype),
        grid=grid,
        in_specs=[
            pl.BlockSpec((tb, input_dim), lambda i: (i, 0)),   # state tile (pipelined)
            pl.BlockSpec((input_dim, h_p), const),
            pl.BlockSpec((1, h_p), const),
            pl.BlockSpec((h_p, h_p), const),
            pl.BlockSpec((1, h_p), const),
            pl.BlockSpec((h_p, head_p), const),
            pl.BlockSpec((1, head_p), const),
        ],
        out_specs=pl.BlockSpec((tb, head_p), lambda i: (i, 0)),
        compiler_params=pltpu.CompilerParams(
            dimension_semantics=("parallel",),                 # 2 TCs on v7x
            vmem_limit_bytes=vmem_limit),
        cost_estimate=pl.CostEstimate(
            flops=flops,
            transcendentals=b_pad * a_lanes,                   # softmax exp
            bytes_accessed=bytes_accessed),
    )(x, packed["w1"], packed["b1"], packed["w2"], packed["b2"],
      packed["wh"], packed["bh"])

    # slice the packed lane-dense slab back into the three logical outputs
    probs = out[:batch, 0:output_dim]
    recon = out[:batch, a_lanes:a_lanes + input_dim]
    value = out[:batch, a_lanes + input_dim:a_lanes + input_dim + 1]
    return probs, value, recon


# --------------------------------------------------------------------------
# Pure-JAX reference (unpadded, f32) for correctness checking
# --------------------------------------------------------------------------
def reference_forward(state, p):
    h = jnp.maximum(state @ p["w1"] + p["b1"], 0.0)
    latent = jnp.maximum(h @ p["w2"] + p["b2"], 0.0)
    probs = jax.nn.softmax(latent @ p["wa"] + p["ba"], axis=-1)
    value = latent @ p["wc"] + p["bc"]
    recon = jnp.maximum(latent @ p["wd"] + p["bd"], 0.0)
    return probs, value, recon


if __name__ == "__main__":
    batch, input_dim, output_dim, hidden_dim = 2, 16, 8, 32

    key = jax.random.PRNGKey(0)
    k_state, k_params = jax.random.split(key)
    state = jax.random.normal(k_state, (batch, input_dim), dtype=jnp.float32)
    params = init_params(k_params, input_dim, output_dim, hidden_dim)

    rp, rv, rr = reference_forward(state, params)

    # ---- f32 packing: strict correctness vs. the pure-JAX reference ----
    packed_f32 = pack_params(params, input_dim, output_dim, hidden_dim,
                             dtype=jnp.float32)
    p32, v32, r32 = ppo_forward(state, packed_f32,
                                input_dim=input_dim, output_dim=output_dim)
    jax.block_until_ready((p32, v32, r32))
    assert p32.shape == (batch, output_dim)
    assert v32.shape == (batch, 1)
    assert r32.shape == (batch, input_dim)
    assert jnp.allclose(p32, rp, atol=1e-5)
    assert jnp.allclose(v32, rv, atol=1e-5)
    assert jnp.allclose(r32, rr, atol=1e-5)
    assert jnp.allclose(jnp.sum(p32, axis=-1), 1.0, atol=1e-5)

    # ---- bf16 packing (fast / default path): relaxed tolerance ----
    packed_bf16 = pack_params(params, input_dim, output_dim, hidden_dim,
                              dtype=jnp.bfloat16)
    pb, vb, rb = ppo_forward(state, packed_bf16,
                             input_dim=input_dim, output_dim=output_dim)
    jax.block_until_ready((pb, vb, rb))
    assert pb.shape == (batch, output_dim) and pb.dtype == jnp.bfloat16
    assert vb.shape == (batch, 1)
    assert rb.shape == (batch, input_dim)
    assert jnp.allclose(pb.astype(jnp.float32), rp, atol=1e-1)
    assert jnp.allclose(vb.astype(jnp.float32), rv, atol=1e-1, rtol=1e-1)
    assert jnp.allclose(rb.astype(jnp.float32), rr, atol=1e-1, rtol=1e-1)
    assert jnp.allclose(jnp.sum(pb.astype(jnp.float32), axis=-1), 1.0, atol=5e-2)

    print("KERNEL_OK")
</pallas_src>

<mosaic_0001>
module attributes {stable_mosaic.version = 11 : i64} {
  func.func @ppo_kernel(%arg0: i32, %arg1: memref<8x16xf32, #tpu.memory_space<vmem>>, %arg2: memref<16x128xf32, #tpu.memory_space<vmem>>, %arg3: memref<1x128xf32, #tpu.memory_space<vmem>>, %arg4: memref<128x128xf32, #tpu.memory_space<vmem>>, %arg5: memref<1x128xf32, #tpu.memory_space<vmem>>, %arg6: memref<128x256xf32, #tpu.memory_space<vmem>>, %arg7: memref<1x256xf32, #tpu.memory_space<vmem>>, %arg8: memref<8x256xf32, #tpu.memory_space<vmem>>) attributes {dimension_semantics = [#tpu.dimension_semantics<parallel>], iteration_bounds = array<i64: 1>, scalar_prefetch = 0 : i64, scratch_operands = 0 : i64, tpu.core_type = #tpu.core_type<tc>, window_params = [{transform_indices = @transform_0, window_bounds = array<i64: 8, 16>}, {pipeline_mode = #tpu.pipeline_mode<synchronous>, transform_indices = @transform_1, window_bounds = array<i64: 16, 128>}, {pipeline_mode = #tpu.pipeline_mode<synchronous>, transform_indices = @transform_2, window_bounds = array<i64: 1, 128>}, {pipeline_mode = #tpu.pipeline_mode<synchronous>, transform_indices = @transform_3, window_bounds = array<i64: 128, 128>}, {pipeline_mode = #tpu.pipeline_mode<synchronous>, transform_indices = @transform_4, window_bounds = array<i64: 1, 128>}, {pipeline_mode = #tpu.pipeline_mode<synchronous>, transform_indices = @transform_5, window_bounds = array<i64: 128, 256>}, {pipeline_mode = #tpu.pipeline_mode<synchronous>, transform_indices = @transform_6, window_bounds = array<i64: 1, 256>}, {transform_indices = @transform_7, window_bounds = array<i64: 8, 256>}]} {
    %c0 = arith.constant 0 : index
    %c0_0 = arith.constant 0 : index
    %0 = vector.load %arg1[%c0, %c0_0] : memref<8x16xf32, #tpu.memory_space<vmem>>, vector<8x16xf32>
    %c0_1 = arith.constant 0 : index
    %c0_2 = arith.constant 0 : index
    %1 = vector.load %arg2[%c0_1, %c0_2] : memref<16x128xf32, #tpu.memory_space<vmem>>, vector<16x128xf32>
    %cst = arith.constant dense<0.000000e+00> : vector<8x128xf32>
    %2 = tpu.matmul %0, %1, %cst {dimension_numbers = #tpu.dot_dimension_numbers<[1], [0], [0], [1], [0, 0, 1, 1], [], []>} : vector<8x16xf32>, vector<16x128xf32>, vector<8x128xf32> -> vector<8x128xf32>
    %c0_3 = arith.constant 0 : index
    %c0_4 = arith.constant 0 : index
    %3 = vector.load %arg3[%c0_3, %c0_4] : memref<1x128xf32, #tpu.memory_space<vmem>>, vector<1x128xf32>
    %4 = vector.broadcast %3 : vector<1x128xf32> to vector<8x128xf32>
    %5 = arith.addf %2, %4 : vector<8x128xf32>
    %cst_5 = arith.constant 0.000000e+00 : f32
    %6 = vector.broadcast %cst_5 : f32 to vector<8x128xf32>
    %7 = arith.maximumf %5, %6 : vector<8x128xf32>
    %c0_6 = arith.constant 0 : index
    %c0_7 = arith.constant 0 : index
    %8 = vector.load %arg4[%c0_6, %c0_7] : memref<128x128xf32, #tpu.memory_space<vmem>>, vector<128x128xf32>
    %cst_8 = arith.constant dense<0.000000e+00> : vector<8x128xf32>
    %9 = tpu.matmul %7, %8, %cst_8 {dimension_numbers = #tpu.dot_dimension_numbers<[1], [0], [0], [1], [0, 0, 1, 1], [], []>} : vector<8x128xf32>, vector<128x128xf32>, vector<8x128xf32> -> vector<8x128xf32>
    %c0_9 = arith.constant 0 : index
    %c0_10 = arith.constant 0 : index
    %10 = vector.load %arg5[%c0_9, %c0_10] : memref<1x128xf32, #tpu.memory_space<vmem>>, vector<1x128xf32>
    %11 = vector.broadcast %10 : vector<1x128xf32> to vector<8x128xf32>
    %12 = arith.addf %9, %11 : vector<8x128xf32>
    %cst_11 = arith.constant 0.000000e+00 : f32
    %13 = vector.broadcast %cst_11 : f32 to vector<8x128xf32>
    %14 = arith.maximumf %12, %13 : vector<8x128xf32>
    %c0_12 = arith.constant 0 : index
    %c0_13 = arith.constant 0 : index
    %15 = vector.load %arg6[%c0_12, %c0_13] : memref<128x256xf32, #tpu.memory_space<vmem>>, vector<128x256xf32>
    %cst_14 = arith.constant dense<0.000000e+00> : vector<8x256xf32>
    %16 = tpu.matmul %14, %15, %cst_14 {dimension_numbers = #tpu.dot_dimension_numbers<[1], [0], [0], [1], [0, 0, 1, 1], [], []>} : vector<8x128xf32>, vector<128x256xf32>, vector<8x256xf32> -> vector<8x256xf32>
    %c0_15 = arith.constant 0 : index
    %c0_16 = arith.constant 0 : index
    %17 = vector.load %arg7[%c0_15, %c0_16] : memref<1x256xf32, #tpu.memory_space<vmem>>, vector<1x256xf32>
    %18 = vector.broadcast %17 : vector<1x256xf32> to vector<8x256xf32>
    %19 = arith.addf %16, %18 : vector<8x256xf32>
    %20 = vector.extract_strided_slice %19 {offsets = [0, 0], sizes = [8, 128], strides = [1, 1]} : vector<8x256xf32> to vector<8x128xf32>
    %cst_17 = arith.constant dense<0xFF800000> : vector<8xf32>
    %21 = vector.multi_reduction <maximumf>, %20, %cst_17 [1] : vector<8x128xf32> to vector<8xf32>
    %22 = vector.shape_cast %21 : vector<8xf32> to vector<8x1xf32>
    %23 = vector.broadcast %22 : vector<8x1xf32> to vector<8x128xf32>
    %24 = arith.subf %20, %23 : vector<8x128xf32>
    %25 = math.exp %24 : vector<8x128xf32>
    %cst_18 = arith.constant dense<0.000000e+00> : vector<8xf32>
    %26 = vector.multi_reduction <add>, %25, %cst_18 [1] : vector<8x128xf32> to vector<8xf32>
    %27 = vector.shape_cast %26 : vector<8xf32> to vector<8x1xf32>
    %28 = tpu.reciprocal %27 : vector<8x1xf32> -> vector<8x1xf32>
    %29 = vector.broadcast %28 : vector<8x1xf32> to vector<8x128xf32>
    %30 = arith.mulf %25, %29 : vector<8x128xf32>
    %c0_19 = arith.constant 0 : index
    %c0_20 = arith.constant 0 : index
    %31 = vector.load %arg8[%c0_19, %c0_20] : memref<8x256xf32, #tpu.memory_space<vmem>>, vector<8x128xf32>
    tpu.vector_store %arg8[%c0_19, %c0_20], %30 {strides = array<i32>} : memref<8x256xf32, #tpu.memory_space<vmem>>, vector<8x128xf32>,
    %32 = vector.extract_strided_slice %19 {offsets = [0, 128], sizes = [8, 128], strides = [1, 1]} : vector<8x256xf32> to vector<8x128xf32>
    %33 = tpu.iota {dimensions = array<i32: 1>} : vector<8x128xi32>
    %c16_i32 = arith.constant 16 : i32
    %34 = vector.broadcast %c16_i32 : i32 to vector<8x128xi32>
    %35 = arith.cmpi slt, %33, %34 : vector<8x128xi32>
    %cst_21 = arith.constant 0.000000e+00 : f32
    %36 = vector.broadcast %cst_21 : f32 to vector<8x128xf32>
    %37 = arith.maximumf %32, %36 : vector<8x128xf32>
    %38 = arith.select %35, %37, %32 : vector<8x128xi1>, vector<8x128xf32>
    %c0_22 = arith.constant 0 : index
    %c128 = arith.constant 128 : index
    %39 = vector.load %arg8[%c0_22, %c128] : memref<8x256xf32, #tpu.memory_space<vmem>>, vector<8x128xf32>
    tpu.vector_store %arg8[%c0_22, %c128], %38 {strides = array<i32>} : memref<8x256xf32, #tpu.memory_space<vmem>>, vector<8x128xf32>,
    return
  }
  func.func @transform_0(%arg0: i32) -> (i32, i32) {
    %c0_i32 = arith.constant 0 : i32
    %c0_i32_0 = arith.constant 0 : i32
    return %arg0, %c0_i32 : i32, i32
  }
  func.func @transform_1(%arg0: i32) -> (i32, i32) {
    %c0_i32 = arith.constant 0 : i32
    %c0_i32_0 = arith.constant 0 : i32
    %c0_i32_1 = arith.constant 0 : i32
    return %c0_i32, %c0_i32_0 : i32, i32
  }
  func.func @transform_2(%arg0: i32) -> (i32, i32) {
    %c0_i32 = arith.constant 0 : i32
    %c0_i32_0 = arith.constant 0 : i32
    %c0_i32_1 = arith.constant 0 : i32
    return %c0_i32, %c0_i32_0 : i32, i32
  }
  func.func @transform_3(%arg0: i32) -> (i32, i32) {
    %c0_i32 = arith.constant 0 : i32
    %c0_i32_0 = arith.constant 0 : i32
    %c0_i32_1 = arith.constant 0 : i32
    return %c0_i32, %c0_i32_0 : i32, i32
  }
  func.func @transform_4(%arg0: i32) -> (i32, i32) {
    %c0_i32 = arith.constant 0 : i32
    %c0_i32_0 = arith.constant 0 : i32
    %c0_i32_1 = arith.constant 0 : i32
    return %c0_i32, %c0_i32_0 : i32, i32
  }
  func.func @transform_5(%arg0: i32) -> (i32, i32) {
    %c0_i32 = arith.constant 0 : i32
    %c0_i32_0 = arith.constant 0 : i32
    %c0_i32_1 = arith.constant 0 : i32
    return %c0_i32, %c0_i32_0 : i32, i32
  }
  func.func @transform_6(%arg0: i32) -> (i32, i32) {
    %c0_i32 = arith.constant 0 : i32
    %c0_i32_0 = arith.constant 0 : i32
    %c0_i32_1 = arith.constant 0 : i32
    return %c0_i32, %c0_i32_0 : i32, i32
  }
  func.func @transform_7(%arg0: i32) -> (i32, i32) {
    %c0_i32 = arith.constant 0 : i32
    %c0_i32_0 = arith.constant 0 : i32
    return %arg0, %c0_i32 : i32, i32
  }
}

</mosaic_0001>

<llo_original>
// kernel: tpu_custom_call.1
$region0: #{tpu_custom_call.1}
  #allocation0 [shape = 'u32[]', space=smem, size = 0x4, offset = 0x4, fixed_abs, tag = 'smem constant byte address 0x4 - core index']
  #allocation1 [shape = 'u32[144,128]{1,0:T(1,128)}', space=vmem, size = 0x12000, scoped, tag = 'internal scratch']
  %s0 = inlined_call_operand.hbm [shape: f32[8,16], index: 0, kind: input, shape index: {}]
  %s1 = inlined_call_operand.hbm [shape: f32[16,128], index: 1, kind: input, shape index: {}]
  %s2 = inlined_call_operand.vmem [shape: f32[1,128], index: 2, kind: input, shape index: {}]
  %s3 = inlined_call_operand.hbm [shape: f32[128,128], index: 3, kind: input, shape index: {}]
  %s4 = inlined_call_operand.vmem [shape: f32[1,128], index: 4, kind: input, shape index: {}]
  %s5 = inlined_call_operand.hbm [shape: f32[128,256], index: 5, kind: input, shape index: {}]
  %s6 = inlined_call_operand.vmem [shape: f32[1,256], index: 6, kind: input, shape index: {}]
  %s7 = inlined_call_operand.hbm [shape: f32[8,256], index: 7, kind: output, shape index: {}]
  %s8 = sld [smem:[#allocation0]]
  $region54: #{tpu_custom_call.1} parent=0
    _
  %s10 = ssub.s32 1, %s8
  %s11 = scalar_select 0, %s10, %s8
  $region1: #{tpu_custom_call.1} parent=0
    #allocation2 [shape = 'u8[4096]{0}', space=vmem, size = 0x1000, scoped, tag = 'input window, operand 0, single buffered']
    #allocation3 [shape = 's32[1]{0}', space=sflag, size = 0x4, scoped, tag = 'scoped memory for tpu_custom_call.1']
    #allocation4 [shape = 's32[1]{0}', space=sflag, size = 0x4, scoped, tag = 'scoped memory for tpu_custom_call.1']
    #allocation5 [shape = 'u8[8192]{0}', space=vmem, size = 0x2000, scoped, tag = 'input window, operand 1, single buffered']
    #allocation6 [shape = 's32[1]{0}', space=sflag, size = 0x4, scoped, tag = 'scoped memory for tpu_custom_call.1']
    #allocation7 [shape = 'u8[65536]{0}', space=vmem, size = 0x10000, scoped, tag = 'input window, operand 3, single buffered']
    #allocation8 [shape = 'u8[131072]{0}', space=vmem, size = 0x20000, scoped, tag = 'input window, operand 5, single buffered']
    #allocation9 [shape = 's32[1]{0}', space=sflag, size = 0x4, scoped, tag = 'scoped memory for tpu_custom_call.1']
    #allocation10 [shape = 'u8[8192]{0}', space=vmem, size = 0x2000, scoped, tag = 'output window, operand 0, single buffered']
    %12 = vsyncpa [#allocation3], 0
    %13 = vsyncpa [#allocation6], 0
    %14 = vsyncpa [#allocation9], 0
    %15 = vsyncpa [#allocation4], 0
    // Predicated region
    $region2: #{tpu_custom_call.1} parent=1 // pred_check
      _
    $region3: #{tpu_custom_call.1} parent=1 // pred_check_branch
      %17 = sbr.rel (0) target = $region5
    $region4: #{tpu_custom_call.1} parent=1 // pred_region
      %s19 = ssub.s32 128, 128
      %20 = vsyncadd [#allocation3], %s19
      %s22 = sshll.u32 [#allocation2], 4
      %s23 = int_to_ptr.vmem [resolvable:$true] %s22
      %25 = dma.hbm_to_vmem [thread:$0]  %s0, 128, %s23, [#allocation3]
    $region5: #{tpu_custom_call.1} parent=1 // pred_fallthru
      _
    // Predicated region
    $region6: #{tpu_custom_call.1} parent=1 // pred_check
      _
    $region7: #{tpu_custom_call.1} parent=1 // pred_check_branch
      %27 = sbr.rel (0) target = $region9
    $region8: #{tpu_custom_call.1} parent=1 // pred_region
      %s29 = ssub.s32 256, 256
      %30 = vsyncadd [#allocation6], %s29
      %s31 = sshll.u32 [#allocation5], 4
      %s32 = int_to_ptr.vmem [resolvable:$true] %s31
      %37 = dma.hbm_to_vmem [thread:$0]  %s1, 256, %s32, [#allocation6], 128, 128, 8
    $region9: #{tpu_custom_call.1} parent=1 // pred_fallthru
      _
    // Predicated region
    $region10: #{tpu_custom_call.1} parent=1 // pred_check
      _
    $region11: #{tpu_custom_call.1} parent=1 // pred_check_branch
      %39 = sbr.rel (0) target = $region13
    $region12: #{tpu_custom_call.1} parent=1 // pred_region
      _
    $region13: #{tpu_custom_call.1} parent=1 // pred_fallthru
      _
    // Predicated region
    $region14: #{tpu_custom_call.1} parent=1 // pred_check
      _
    $region15: #{tpu_custom_call.1} parent=1 // pred_check_branch
      %41 = sbr.rel (0) target = $region17
    $region16: #{tpu_custom_call.1} parent=1 // pred_region
      %s43 = ssub.s32 2048, 2048
      %44 = vsyncadd [#allocation6], %s43
      %s45 = sshll.u32 [#allocation7], 4
      %s46 = int_to_ptr.vmem [resolvable:$true] %s45
      %51 = dma.hbm_to_vmem [thread:$0]  %s3, 2048, %s46, [#allocation6], 128, 128, 8
    $region17: #{tpu_custom_call.1} parent=1 // pred_fallthru
      _
    // Predicated region
    $region18: #{tpu_custom_call.1} parent=1 // pred_check
      _
    $region19: #{tpu_custom_call.1} parent=1 // pred_check_branch
      %53 = sbr.rel (0) target = $region21
    $region20: #{tpu_custom_call.1} parent=1 // pred_region
      _
    $region21: #{tpu_custom_call.1} parent=1 // pred_fallthru
      _
    // Predicated region
    $region22: #{tpu_custom_call.1} parent=1 // pred_check
      _
    $region23: #{tpu_custom_call.1} parent=1 // pred_check_branch
      %55 = sbr.rel (0) target = $region25
    $region24: #{tpu_custom_call.1} parent=1 // pred_region
      %s57 = ssub.s32 4096, 4096
      %58 = vsyncadd [#allocation9], %s57
      %s59 = sshll.u32 [#allocation8], 4
      %s60 = int_to_ptr.vmem [resolvable:$true] %s59
      %65 = dma.hbm_to_vmem [thread:$0]  %s5, 4096, %s60, [#allocation9], 256, 256, 16
    $region25: #{tpu_custom_call.1} parent=1 // pred_fallthru
      _
    // Predicated region
    $region26: #{tpu_custom_call.1} parent=1 // pred_check
      _
    $region27: #{tpu_custom_call.1} parent=1 // pred_check_branch
      %67 = sbr.rel (0) target = $region29
    $region28: #{tpu_custom_call.1} parent=1 // pred_region
      _
    $region29: #{tpu_custom_call.1} parent=1 // pred_fallthru
      _
    // Predicated region
    $region30: #{tpu_custom_call.1} parent=1 // pred_check
      _
    $region31: #{tpu_custom_call.1} parent=1 // pred_check_branch
      %69 = sbr.rel (0) target = $region33
    $region32: #{tpu_custom_call.1} parent=1 // pred_region
      %70 = dma.done [#allocation3], 128
    $region33: #{tpu_custom_call.1} parent=1 // pred_fallthru
      _
    // Predicated region
    $region34: #{tpu_custom_call.1} parent=1 // pred_check
      _
    $region35: #{tpu_custom_call.1} parent=1 // pred_check_branch
      %72 = sbr.rel (0) target = $region37
    $region36: #{tpu_custom_call.1} parent=1 // pred_region
      %73 = dma.done [#allocation6], 256
    $region37: #{tpu_custom_call.1} parent=1 // pred_fallthru
      _
    // Predicated region
    $region38: #{tpu_custom_call.1} parent=1 // pred_check
      _
    $region39: #{tpu_custom_call.1} parent=1 // pred_check_branch
      %75 = sbr.rel (0) target = $region41
    $region40: #{tpu_custom_call.1} parent=1 // pred_region
      %76 = dma.done [#allocation6], 2048
    $region41: #{tpu_custom_call.1} parent=1 // pred_fallthru
      _
    // Predicated region
    $region42: #{tpu_custom_call.1} parent=1 // pred_check
      _
    $region43: #{tpu_custom_call.1} parent=1 // pred_check_branch
      %78 = sbr.rel (0) target = $region45
    $region44: #{tpu_custom_call.1} parent=1 // pred_region
      %79 = dma.done [#allocation9], 4096
    $region45: #{tpu_custom_call.1} parent=1 // pred_fallthru
      _
    %v80 = vld [vmem:[#allocation2] sm:$0xff]
    %v81 = vld [vmem:[#allocation5] sm:$0xff]
    %v82 = vld [vmem:[#allocation5 + $0x8] sm:$0xff]
    %v83 = vld [vmem:[%s2] sm:$0x1]
    %v85 = vlaneseq
    %v86 = vshrl.u32 %v85, 7
    %v87 = vsub.s32 0, %v86
    %v88 = vrot.slane %v83, %v87
    %vm90 = vcmask 130048
    %v92 = vsel %vm90, %v80, 0
    %94 = vmatprep.subr.mxu0 0.0
    %95 = vmatpush1.msra.mxu0 0.0
    %96 = vmatprep.subr.mxu0 0.0
    %97 = vmatpush1.msra.mxu0 0.0
    %98 = vmatprep.subr.mxu0 0.0
    %99 = vmatpush1.msra.mxu0 0.0
    %100 = vmatprep.subr.mxu0 0.0
    %101 = vmatpush1.msra.mxu0 0.0
    %102 = vmatprep.subr.mxu0 0.0
    %103 = vmatpush1.msra.mxu0 0.0
    %104 = vmatprep.subr.mxu0 0.0
    %105 = vmatpush1.msra.mxu0 0.0
    %106 = vmatprep.subr.mxu0 0.0
    %107 = vmatpush1.msra.mxu0 0.0
    %108 = vmatprep.subr.mxu0 0.0
    %109 = vmatpush1.msra.mxu0 0.0
    %110 = vmatprep.subr.mxu0 0.0
    %111 = vmatpush1.msra.mxu0 0.0
    %112 = vmatprep.subr.mxu0 0.0
    %113 = vmatpush1.msra.mxu0 0.0
    %114 = vmatprep.subr.mxu0 0.0
    %115 = vmatpush1.msra.mxu0 0.0
    %116 = vmatprep.subr.mxu0 0.0
    %117 = vmatpush1.msra.mxu0 0.0
    %118 = vmatprep.subr.mxu0 0.0
    %119 = vmatpush1.msra.mxu0 0.0
    %120 = vmatprep.subr.mxu0 0.0
    %121 = vmatpush1.msra.mxu0 0.0
    %122 = vmatprep.subr.mxu0 0.0
    %123 = vmatpush1.msra.mxu0 %v82
    %124 = vmatprep.subr.mxu0 0.0
    %125 = vmatpush1.msra.mxu0 %v81
    %126 = vmatprep.subr.mxu0 0.0
    %127 = vmatpush2.msra.mxu0 0.0
    %128 = vmatprep.subr.mxu0 0.0
    %129 = vmatpush2.msra.mxu0 0.0
    %130 = vmatprep.subr.mxu0 0.0
    %131 = vmatpush2.msra.mxu0 0.0
    %132 = vmatprep.subr.mxu0 0.0
    %133 = vmatpush2.msra.mxu0 0.0
    %134 = vmatprep.subr.mxu0 0.0
    %135 = vmatpush2.msra.mxu0 0.0
    %136 = vmatprep.subr.mxu0 0.0
    %137 = vmatpush2.msra.mxu0 0.0
    %138 = vmatprep.subr.mxu0 0.0
    %139 = vmatpush2.msra.mxu0 0.0
    %140 = vmatprep.subr.mxu0 0.0
    %141 = vmatpush2.msra.mxu0 0.0
    %142 = vmatprep.subr.mxu0 0.0
    %143 = vmatpush2.msra.mxu0 0.0
    %144 = vmatprep.subr.mxu0 0.0
    %145 = vmatpush2.msra.mxu0 0.0
    %146 = vmatprep.subr.mxu0 0.0
    %147 = vmatpush2.msra.mxu0 0.0
    %148 = vmatprep.subr.mxu0 0.0
    %149 = vmatpush2.msra.mxu0 0.0
    %150 = vmatprep.subr.mxu0 0.0
    %151 = vmatpush2.msra.mxu0 0.0
    %152 = vmatprep.subr.mxu0 0.0
    %153 = vmatpush2.msra.mxu0 0.0
    %154 = vmatprep.subr.mxu0 0.0
    %155 = vmatpush2.msra.mxu0 0.0
    %156 = vmatprep.subr.mxu0 0.0
    %157 = vmatpush2.msra.mxu0 0.0
    %158 = vmatprep.mubr.f32.mxu0 0.0
    %159 = vmatmul.mubr.f32.gmra.mxu0 %v92
    %v160 = vpop.f32.mrf.mxu0
    %v161 = vadd.f32 %v88, %v160
    %v162 = vpop.f32.mrf.mxu0
    %163 = vdwg.mxu0
    %v164 = vmax.f32 %v161, 0.0
    %v165 = vld [vmem:[#allocation7] sm:$0xff]
    %v166 = vld [vmem:[#allocation7 + $0x8] sm:$0xff]
    %v167 = vld [vmem:[#allocation7 + $0x10] sm:$0xff]
    %v168 = vld [vmem:[#allocation7 + $0x18] sm:$0xff]
    %v169 = vld [vmem:[#allocation7 + $0x20] sm:$0xff]
    %v170 = vld [vmem:[#allocation7 + $0x28] sm:$0xff]
    %v171 = vld [vmem:[#allocation7 + $0x30] sm:$0xff]
    %v172 = vld [vmem:[#allocation7 + $0x38] sm:$0xff]
    %v173 = vld [vmem:[#allocation7 + $0x40] sm:$0xff]
    %v174 = vld [vmem:[#allocation7 + $0x48] sm:$0xff]
    %v175 = vld [vmem:[#allocation7 + $0x50] sm:$0xff]
    %v176 = vld [vmem:[#allocation7 + $0x58] sm:$0xff]
    %v177 = vld [vmem:[#allocation7 + $0x60] sm:$0xff]
    %v178 = vld [vmem:[#allocation7 + $0x68] sm:$0xff]
    %v179 = vld [vmem:[#allocation7 + $0x70] sm:$0xff]
    %v180 = vld [vmem:[#allocation7 + $0x78] sm:$0xff]
    %v181 = vld [vmem:[%s4] sm:$0x1]
    %v183 = vlaneseq
    %v184 = vshrl.u32 %v183, 7
    %v185 = vsub.s32 0, %v184
    %v186 = vrot.slane %v181, %v185
    %188 = vmatprep.subr.mxu0 0.0
    %189 = vmatpush1.msra.mxu0 %v180
    %190 = vmatprep.subr.mxu0 0.0
    %191 = vmatpush1.msra.mxu0 %v179
    %192 = vmatprep.subr.mxu0 0.0
    %193 = vmatpush1.msra.mxu0 %v178
    %194 = vmatprep.subr.mxu0 0.0
    %195 = vmatpush1.msra.mxu0 %v177
    %196 = vmatprep.subr.mxu0 0.0
    %197 = vmatpush1.msra.mxu0 %v176
    %198 = vmatprep.subr.mxu0 0.0
    %199 = vmatpush1.msra.mxu0 %v175
    %200 = vmatprep.subr.mxu0 0.0
    %201 = vmatpush1.msra.mxu0 %v174
    %202 = vmatprep.subr.mxu0 0.0
    %203 = vmatpush1.msra.mxu0 %v173
    %204 = vmatprep.subr.mxu0 0.0
    %205 = vmatpush1.msra.mxu0 %v172
    %206 = vmatprep.subr.mxu0 0.0
    %207 = vmatpush1.msra.mxu0 %v171
    %208 = vmatprep.subr.mxu0 0.0
    %209 = vmatpush1.msra.mxu0 %v170
    %210 = vmatprep.subr.mxu0 0.0
    %211 = vmatpush1.msra.mxu0 %v169
    %212 = vmatprep.subr.mxu0 0.0
    %213 = vmatpush1.msra.mxu0 %v168
    %214 = vmatprep.subr.mxu0 0.0
    %215 = vmatpush1.msra.mxu0 %v167
    %216 = vmatprep.subr.mxu0 0.0
    %217 = vmatpush1.msra.mxu0 %v166
    %218 = vmatprep.subr.mxu0 0.0
    %219 = vmatpush1.msra.mxu0 %v165
    %220 = vmatprep.subr.mxu0 0.0
    %221 = vmatpush2.msra.mxu0 0.0
    %222 = vmatprep.subr.mxu0 0.0
    %223 = vmatpush2.msra.mxu0 0.0
    %224 = vmatprep.subr.mxu0 0.0
    %225 = vmatpush2.msra.mxu0 0.0
    %226 = vmatprep.subr.mxu0 0.0
    %227 = vmatpush2.msra.mxu0 0.0
    %228 = vmatprep.subr.mxu0 0.0
    %229 = vmatpush2.msra.mxu0 0.0
    %230 = vmatprep.subr.mxu0 0.0
    %231 = vmatpush2.msra.mxu0 0.0
    %232 = vmatprep.subr.mxu0 0.0
    %233 = vmatpush2.msra.mxu0 0.0
    %234 = vmatprep.subr.mxu0 0.0
    %235 = vmatpush2.msra.mxu0 0.0
    %236 = vmatprep.subr.mxu0 0.0
    %237 = vmatpush2.msra.mxu0 0.0
    %238 = vmatprep.subr.mxu0 0.0
    %239 = vmatpush2.msra.mxu0 0.0
    %240 = vmatprep.subr.mxu0 0.0
    %241 = vmatpush2.msra.mxu0 0.0
    %242 = vmatprep.subr.mxu0 0.0
    %243 = vmatpush2.msra.mxu0 0.0
    %244 = vmatprep.subr.mxu0 0.0
    %245 = vmatpush2.msra.mxu0 0.0
    %246 = vmatprep.subr.mxu0 0.0
    %247 = vmatpush2.msra.mxu0 0.0
    %248 = vmatprep.subr.mxu0 0.0
    %249 = vmatpush2.msra.mxu0 0.0
    %250 = vmatprep.subr.mxu0 0.0
    %251 = vmatpush2.msra.mxu0 0.0
    %252 = vmatprep.mubr.f32.mxu0 0.0
    %253 = vmatmul.mubr.f32.gmra.mxu0 %v164
    %v254 = vpop.f32.mrf.mxu0
    %v255 = vadd.f32 %v186, %v254
    %v256 = vpop.f32.mrf.mxu0
    %257 = vdwg.mxu0
    %v258 = vmax.f32 %v255, 0.0
    %v259 = vld [vmem:[#allocation8] sm:$0xff]
    %v260 = vld [vmem:[#allocation8 + $0x8] sm:$0xff]
    %v261 = vld [vmem:[#allocation8 + $0x10] sm:$0xff]
    %v262 = vld [vmem:[#allocation8 + $0x18] sm:$0xff]
    %v263 = vld [vmem:[#allocation8 + $0x20] sm:$0xff]
    %v264 = vld [vmem:[#allocation8 + $0x28] sm:$0xff]
    %v265 = vld [vmem:[#allocation8 + $0x30] sm:$0xff]
    %v266 = vld [vmem:[#allocation8 + $0x38] sm:$0xff]
    %v267 = vld [vmem:[#allocation8 + $0x40] sm:$0xff]
    %v268 = vld [vmem:[#allocation8 + $0x48] sm:$0xff]
    %v269 = vld [vmem:[#allocation8 + $0x50] sm:$0xff]
    %v270 = vld [vmem:[#allocation8 + $0x58] sm:$0xff]
    %v271 = vld [vmem:[#allocation8 + $0x60] sm:$0xff]
    %v272 = vld [vmem:[#allocation8 + $0x68] sm:$0xff]
    %v273 = vld [vmem:[#allocation8 + $0x70] sm:$0xff]
    %v274 = vld [vmem:[#allocation8 + $0x78] sm:$0xff]
    %v275 = vld [vmem:[#allocation8 + $0x80] sm:$0xff]
    %v276 = vld [vmem:[#allocation8 + $0x88] sm:$0xff]
    %v277 = vld [vmem:[#allocation8 + $0x90] sm:$0xff]
    %v278 = vld [vmem:[#allocation8 + $0x98] sm:$0xff]
    %v279 = vld [vmem:[#allocation8 + $0xa0] sm:$0xff]
    %v280 = vld [vmem:[#allocation8 + $0xa8] sm:$0xff]
    %v281 = vld [vmem:[#allocation8 + $0xb0] sm:$0xff]
    %v282 = vld [vmem:[#allocation8 + $0xb8] sm:$0xff]
    %v283 = vld [vmem:[#allocation8 + $0xc0] sm:$0xff]
    %v284 = vld [vmem:[#allocation8 + $0xc8] sm:$0xff]
    %v285 = vld [vmem:[#allocation8 + $0xd0] sm:$0xff]
    %v286 = vld [vmem:[#allocation8 + $0xd8] sm:$0xff]
    %v287 = vld [vmem:[#allocation8 + $0xe0] sm:$0xff]
    %v288 = vld [vmem:[#allocation8 + $0xe8] sm:$0xff]
    %v289 = vld [vmem:[#allocation8 + $0xf0] sm:$0xff]
    %v290 = vld [vmem:[#allocation8 + $0xf8] sm:$0xff]
    %v291 = vld [vmem:[%s6] sm:$0x3]
    %v293 = vlaneseq
    %v294 = vshrl.u32 %v293, 7
    %v295 = vsub.s32 0, %v294
    %v296 = vrot.slane %v291, %v295
    %v297 = vlaneseq
    %v298 = vshrl.u32 %v297, 7
    %v299 = vsub.s32 1, %v298
    %v300 = vrot.slane %v291, %v299
    %303 = vmatprep.subr.mxu0 %v290
    %304 = vmatpush1.msra.mxu0 %v289
    %305 = vmatprep.subr.mxu0 %v288
    %306 = vmatpush1.msra.mxu0 %v287
    %307 = vmatprep.subr.mxu0 %v286
    %308 = vmatpush1.msra.mxu0 %v285
    %309 = vmatprep.subr.mxu0 %v284
    %310 = vmatpush1.msra.mxu0 %v283
    %311 = vmatprep.subr.mxu0 %v282
    %312 = vmatpush1.msra.mxu0 %v281
    %313 = vmatprep.subr.mxu0 %v280
    %314 = vmatpush1.msra.mxu0 %v279
    %315 = vmatprep.subr.mxu0 %v278
    %316 = vmatpush1.msra.mxu0 %v277
    %317 = vmatprep.subr.mxu0 %v276
    %318 = vmatpush1.msra.mxu0 %v275
    %319 = vmatprep.subr.mxu0 %v274
    %320 = vmatpush1.msra.mxu0 %v273
    %321 = vmatprep.subr.mxu0 %v272
    %322 = vmatpush1.msra.mxu0 %v271
    %323 = vmatprep.subr.mxu0 %v270
    %324 = vmatpush1.msra.mxu0 %v269
    %325 = vmatprep.subr.mxu0 %v268
    %326 = vmatpush1.msra.mxu0 %v267
    %327 = vmatprep.subr.mxu0 %v266
    %328 = vmatpush1.msra.mxu0 %v265
    %329 = vmatprep.subr.mxu0 %v264
    %330 = vmatpush1.msra.mxu0 %v263
    %331 = vmatprep.subr.mxu0 %v262
    %332 = vmatpush1.msra.mxu0 %v261
    %333 = vmatprep.subr.mxu0 %v260
    %334 = vmatpush1.msra.mxu0 %v259
    %335 = vmatprep.subr.mxu0 0.0
    %336 = vmatpush2.msra.mxu0 0.0
    %337 = vmatprep.subr.mxu0 0.0
    %338 = vmatpush2.msra.mxu0 0.0
    %339 = vmatprep.subr.mxu0 0.0
    %340 = vmatpush2.msra.mxu0 0.0
    %341 = vmatprep.subr.mxu0 0.0
    %342 = vmatpush2.msra.mxu0 0.0
    %343 = vmatprep.subr.mxu0 0.0
    %344 = vmatpush2.msra.mxu0 0.0
    %345 = vmatprep.subr.mxu0 0.0
    %346 = vmatpush2.msra.mxu0 0.0
    %347 = vmatprep.subr.mxu0 0.0
    %348 = vmatpush2.msra.mxu0 0.0
    %349 = vmatprep.subr.mxu0 0.0
    %350 = vmatpush2.msra.mxu0 0.0
    %351 = vmatprep.subr.mxu0 0.0
    %352 = vmatpush2.msra.mxu0 0.0
    %353 = vmatprep.subr.mxu0 0.0
    %354 = vmatpush2.msra.mxu0 0.0
    %355 = vmatprep.subr.mxu0 0.0
    %356 = vmatpush2.msra.mxu0 0.0
    %357 = vmatprep.subr.mxu0 0.0
    %358 = vmatpush2.msra.mxu0 0.0
    %359 = vmatprep.subr.mxu0 0.0
    %360 = vmatpush2.msra.mxu0 0.0
    %361 = vmatprep.subr.mxu0 0.0
    %362 = vmatpush2.msra.mxu0 0.0
    %363 = vmatprep.subr.mxu0 0.0
    %364 = vmatpush2.msra.mxu0 0.0
    %365 = vmatprep.subr.mxu0 0.0
    %366 = vmatpush2.msra.mxu0 0.0
    %367 = vmatprep.mubr.f32.mxu0 0.0
    %368 = vmatmul.mubr.f32.gmra.mxu0 %v258
    %v369 = vpop.f32.mrf.mxu0
    %v370 = vadd.f32 %v296, %v369
    %v371 = vpop.f32.mrf.mxu0
    %v372 = vadd.f32 %v300, %v371
    %373 = vdwg.mxu0
    %374 = vmax.xlane.f32.xlu0 %v370
    %v375 = vpop.xlane.xlu0 %374
    %v376 = vsub.f32 %v370, %v375
    %v377 = vmul.f32 %v376, 1.442695
    %v378 = vpow.pop %v377
    %379 = vadd.xlane.f32.xlu0 %v378
    %v380 = vpop.xlane.xlu0 %379
    %v381 = vrcp.pop %v380
    %v382 = vmul.f32 %v378, %v381
    %383 = vst [vmem:[#allocation10] sm:$0xff] %v382
    %v384 = vlaneseq
    %v385 = vand.u32 %v384, 127
    %vm386 = vcmp.lt.s32.totalorder %v385, 16
    %v387 = vmax.f32 %v372, 0.0
    %v388 = vsel %vm386, %v387, %v372
    %389 = vst [vmem:[#allocation10 + $0x8] sm:$0xff] %v388
    // Predicated region
    $region46: #{tpu_custom_call.1} parent=1 // pred_check
      _
    $region47: #{tpu_custom_call.1} parent=1 // pred_check_branch
      %391 = sbr.rel (0) target = $region49
    $region48: #{tpu_custom_call.1} parent=1 // pred_region
      %s393 = ssub.s32 256, 256
      %394 = vsyncadd [#allocation4], %s393
      %s396 = sshll.u32 [#allocation10], 4
      %s397 = int_to_ptr.vmem [resolvable:$true] %s396
      %399 = dma.vmem_to_hbm [thread:$0]  %s397, 256, %s7, [#allocation4]
    $region49: #{tpu_custom_call.1} parent=1 // pred_fallthru
      _
    // Predicated region
    $region50: #{tpu_custom_call.1} parent=1 // pred_check
      _
    $region51: #{tpu_custom_call.1} parent=1 // pred_check_branch
      %401 = sbr.rel (0) target = $region53
    $region52: #{tpu_custom_call.1} parent=1 // pred_region
      %402 = dma.done [#allocation4], 256
    $region53: #{tpu_custom_call.1} parent=1 // pred_fallthru
      _
    %403 = vsyncpa [#allocation3], 1
    %404 = vsyncpa [#allocation6], 1
    %405 = vsyncpa [#allocation9], 1
    %406 = vsyncpa [#allocation4], 1

</llo_original>
